<compile_context>
chip_gen: v6e
topology: v6e:2x2x1
jax: 0.10.0
libtpu: 0.0.40
codegen_flags: <defaults>
</compile_context>

<pallas_src>
import math
from functools import partial

import jax
import jax.numpy as jnp
from jax import lax
from jax.experimental import pallas as pl
from jax.experimental.pallas import tpu as pltpu


# ----------------------------- small helpers ---------------------------------

def _softmax_last(x):
    x = x - jnp.max(x, axis=-1, keepdims=True)
    e = jnp.exp(x)
    return e / jnp.sum(e, axis=-1, keepdims=True)


def _dot(a, b):
    return jnp.dot(a, b, preferred_element_type=jnp.float32)


def _dot_nt(a, b):
    # (i, d) x (j, d) -> (i, j): contract the trailing feature dim of both (A @ B^T).
    return lax.dot_general(a, b, (((1,), (1,)), ((), ())),
                           preferred_element_type=jnp.float32)


def _pool_matrix(m, n, l):
    # (m, n) matrix with 1/l on entries (i, j) where i*l <= j < (i+1)*l:
    # landmark means become one MXU matmul (no in-kernel reshape / relayout).
    ri = lax.broadcasted_iota(jnp.int32, (m, n), 0)
    ci = lax.broadcasted_iota(jnp.int32, (m, n), 1)
    lower = ri * l
    ingroup = (ci >= lower) & (ci < lower + l)
    return jnp.where(ingroup, 1.0 / l, 0.0).astype(jnp.float32)


# ------------------------------- kernels --------------------------------------

def _make_stats_kernel(m, l, scale):
    """Pass 1: global max of |attn2| row-sums / col-sums over ALL (batch, head)."""

    def kernel(q_ref, k_ref, stats_ref):
        n = q_ref.shape[-2]

        @pl.when((pl.program_id(0) == 0) & (pl.program_id(1) == 0))
        def _():
            stats_ref[...] = jnp.zeros_like(stats_ref)

        q = q_ref[0, 0].astype(jnp.float32) * scale
        k = k_ref[0, 0].astype(jnp.float32)
        pool = _pool_matrix(m, n, l)
        q_land = _dot(pool, q)                          # (m, d)
        k_land = _dot(pool, k)                          # (m, d)
        attn2 = _softmax_last(_dot_nt(q_land, k_land))  # (m, m)

        a = jnp.abs(attn2)
        colmax = jnp.max(jnp.sum(a, axis=-1, keepdims=True))
        rowmax = jnp.max(jnp.sum(a, axis=-2, keepdims=True))
        lane = lax.broadcasted_iota(jnp.int32, (1, 2), 1)
        cand = jnp.where(lane == 0, colmax, rowmax)
        stats_ref[...] = jnp.maximum(stats_ref[...], cand)

    return kernel


def _make_nystrom_kernel(m, l, ksize, pinv_iters, scale, residual):
    """Pass 2: full per-(batch, head) Nystrom attention + residual depthwise conv."""
    pad = ksize // 2

    def kernel(q_ref, k_ref, v_ref, w_ref, stats_ref, o_ref):
        n = q_ref.shape[-2]
        head = pl.program_id(1)

        q = q_ref[0, 0].astype(jnp.float32) * scale
        k = k_ref[0, 0].astype(jnp.float32)
        v = v_ref[0, 0].astype(jnp.float32)

        pool = _pool_matrix(m, n, l)
        q_land = _dot(pool, q)                          # (m, d)
        k_land = _dot(pool, k)                          # (m, d)

        attn1 = _softmax_last(_dot_nt(q, k_land))       # (n, m)
        attn2 = _softmax_last(_dot_nt(q_land, k_land))  # (m, m)
        attn3 = _softmax_last(_dot_nt(q_land, k))       # (m, n)

        # Moore-Penrose iterative pseudo-inverse of attn2 (statically unrolled).
        zscale = 1.0 / (stats_ref[0, 0] * stats_ref[0, 1])
        ii = lax.broadcasted_iota(jnp.int32, (m, m), 0)
        jj = lax.broadcasted_iota(jnp.int32, (m, m), 1)
        ident = jnp.where(ii == jj, 1.0, 0.0).astype(jnp.float32)
        z = attn2.T * zscale
        for _ in range(pinv_iters):
            xz = _dot(attn2, z)
            t = 7.0 * ident - xz
            t = 15.0 * ident - _dot(xz, t)
            t = 13.0 * ident - _dot(xz, t)
            z = 0.25 * _dot(z, t)

        out = _dot(attn1, _dot(z, _dot(attn3, v)))      # (n, d)

        if residual:
            # Depthwise res_conv along the sequence ('same' padding, cross-correlation),
            # written as a banded (n, n) matmul so it runs on the MXU.
            r2 = lax.broadcasted_iota(jnp.int32, (n, n), 0)
            c2 = lax.broadcasted_iota(jnp.int32, (n, n), 1)
            diff = c2 - r2
            conv_mat = jnp.zeros((n, n), jnp.float32)
            for tap in range(ksize):                    # K=33 scalar taps from SMEM
                conv_mat = conv_mat + jnp.where(diff == (tap - pad),
                                                w_ref[head, tap], 0.0)
            out = out + _dot(conv_mat, v)

        o_ref[0, 0] = out.astype(o_ref.dtype)

    return kernel


# ------------------------------- wrapper ---------------------------------------

def nystrom_attention_forward(q, k, v, res_conv_weight, *, num_landmarks,
                              pinv_iterations=6, scale=None, residual=True):
    """Forward pass of NystromAttention for q, k, v of shape (b, heads, n, dim_head)."""
    b, h, n, d = q.shape
    m = num_landmarks
    if scale is None:
        scale = d ** -0.5
    # TODO(synk): mask support, the n % m != 0 front-padding branch (with its eps
    # landmark divisor) and return_attn are not implemented in the Pallas path.
    assert n % m == 0, "sequence length must be a multiple of num_landmarks"
    l = n // m

    if residual:
        ksize = res_conv_weight.shape[2]
        w2d = res_conv_weight.reshape(h, ksize).astype(jnp.float32)   # (h, K) taps
    else:
        ksize = 1
        w2d = jnp.zeros((h, 1), jnp.float32)

    qkv_spec = pl.BlockSpec((1, 1, n, d), lambda ib, ih: (ib, ih, 0, 0))
    smem_spec = pl.BlockSpec(memory_space=pltpu.MemorySpace.SMEM)

    # Pass 1: global maxima for the pinv init scale (sequential grid, resident
    # (1, 2) accumulator output: [max col-sum, max row-sum] of |attn2|).
    stats = pl.pallas_call(
        _make_stats_kernel(m, l, scale),
        out_shape=jax.ShapeDtypeStruct((1, 2), jnp.float32),
        grid=(b, h),
        in_specs=[qkv_spec, qkv_spec],
        out_specs=pl.BlockSpec((1, 2), lambda ib, ih: (0, 0)),
        compiler_params=pltpu.CompilerParams(
            dimension_semantics=("arbitrary", "arbitrary")),
    )(q, k)

    # Pass 2: the attention itself; (batch, head) grid is fully parallel (megacore).
    out = pl.pallas_call(
        _make_nystrom_kernel(m, l, ksize, pinv_iterations, scale, residual),
        out_shape=jax.ShapeDtypeStruct((b, h, n, d), q.dtype),
        grid=(b, h),
        in_specs=[qkv_spec, qkv_spec, qkv_spec, smem_spec, smem_spec],
        out_specs=qkv_spec,
        compiler_params=pltpu.CompilerParams(
            dimension_semantics=("parallel", "parallel")),
    )(q, k, v, w2d, stats)

    # The torch code's trailing `out = out[:, -n:]` only trims front padding; with
    # n % m == 0 there is none, so it is a no-op here.
    return out


class NystromAttentionPallas:
    """Mirror of the PyTorch NystromAttention module (forward-pass only).

    The to_qkv / to_out projections are commented out in the torch source; forward
    consumes pre-split q, k, v of shape (b, heads, n, dim_head)."""

    def __init__(self, dim, dim_head=64, heads=8, num_landmarks=256,
                 pinv_iterations=6, residual=True, residual_conv_kernel=33,
                 eps=1e-8, dropout=0.0, *, key=None):
        self.eps = eps                      # only used by the (unimplemented) mask path
        self.num_landmarks = num_landmarks
        self.pinv_iterations = pinv_iterations
        self.heads = heads
        self.scale = dim_head ** -0.5
        self.residual = residual
        self.residual_conv_kernel = residual_conv_kernel
        self.res_conv_weight = None
        if residual:
            if key is None:
                key = jax.random.PRNGKey(0)
            # nn.Conv2d(heads, heads, (K, 1), groups=heads, bias=False) weight:
            # shape (heads, 1, K, 1), kaiming-uniform-style bound 1/sqrt(fan_in).
            bound = 1.0 / math.sqrt(residual_conv_kernel)
            self.res_conv_weight = jax.random.uniform(
                key, (heads, 1, residual_conv_kernel, 1),
                minval=-bound, maxval=bound, dtype=jnp.float32)

    def __call__(self, q, k, v, mask=None, return_attn=False):
        if mask is not None or return_attn:
            # TODO(synk): mask / return_attn paths not implemented in Pallas.
            raise NotImplementedError("mask / return_attn not supported")
        return nystrom_attention_forward(
            q, k, v, self.res_conv_weight,
            num_landmarks=self.num_landmarks,
            pinv_iterations=self.pinv_iterations,
            scale=self.scale, residual=self.residual)


# ------------------------------ reference --------------------------------------

def nystrom_attention_reference(q, k, v, res_conv_weight, *, num_landmarks,
                                pinv_iterations, scale, residual=True):
    """Pure-JAX mirror of the torch forward (no mask, n % m == 0)."""
    b, h, n, d = q.shape
    m = num_landmarks
    l = n // m
    hp = lax.Precision.HIGHEST
    mm = partial(jnp.matmul, precision=hp)

    qs = q * scale
    q_land = jnp.mean(qs.reshape(b, h, m, l, d), axis=3)
    k_land = jnp.mean(k.reshape(b, h, m, l, d), axis=3)

    sim1 = jnp.einsum('bhid,bhjd->bhij', qs, k_land, precision=hp)
    sim2 = jnp.einsum('bhid,bhjd->bhij', q_land, k_land, precision=hp)
    sim3 = jnp.einsum('bhid,bhjd->bhij', q_land, k, precision=hp)
    attn1 = jax.nn.softmax(sim1, axis=-1)
    attn2 = jax.nn.softmax(sim2, axis=-1)
    attn3 = jax.nn.softmax(sim3, axis=-1)

    # moore_penrose_iter_pinv (global max over the whole tensor, as in torch)
    absx = jnp.abs(attn2)
    z = jnp.swapaxes(attn2, -1, -2) / (jnp.max(absx.sum(-1)) * jnp.max(absx.sum(-2)))
    ident = jnp.eye(m, dtype=jnp.float32)[None, None]
    for _ in range(pinv_iterations):
        xz = mm(attn2, z)
        z = 0.25 * mm(z, 13 * ident - mm(xz, 15 * ident - mm(xz, 7 * ident - xz)))

    out = mm(mm(attn1, z), mm(attn3, v))

    if residual:
        ksz = res_conv_weight.shape[2]
        res = lax.conv_general_dilated(
            v, res_conv_weight, window_strides=(1, 1),
            padding=((ksz // 2, ksz // 2), (0, 0)),
            dimension_numbers=('NCHW', 'OIHW', 'NCHW'),
            feature_group_count=h, precision=hp)
        out = out + res
    return out


# --------------------------------- main -----------------------------------------

if __name__ == "__main__":
    key = jax.random.PRNGKey(0)
    kq, kk, kv, kw = jax.random.split(key, 4)

    b, heads, seq, dim_head = 2, 4, 256, 64
    num_landmarks = 32           # l = seq / m = 8 tokens per landmark
    pinv_iterations = 6
    ksize = 33
    dim = heads * dim_head

    module = NystromAttentionPallas(
        dim, dim_head=dim_head, heads=heads, num_landmarks=num_landmarks,
        pinv_iterations=pinv_iterations, residual=True,
        residual_conv_kernel=ksize, key=kw)

    q = jax.random.normal(kq, (b, heads, seq, dim_head), dtype=jnp.float32)
    k = jax.random.normal(kk, (b, heads, seq, dim_head), dtype=jnp.float32)
    v = jax.random.normal(kv, (b, heads, seq, dim_head), dtype=jnp.float32)

    out = module(q, k, v)
    out = jax.block_until_ready(out)
    assert out.shape == (b, heads, seq, dim_head) and out.dtype == q.dtype

    ref = nystrom_attention_reference(
        q, k, v, module.res_conv_weight, num_landmarks=num_landmarks,
        pinv_iterations=pinv_iterations, scale=module.scale, residual=True)
    ref = jax.block_until_ready(ref)

    max_err = float(jnp.max(jnp.abs(out - ref)))
    assert jnp.allclose(out, ref, rtol=2e-2, atol=2e-2), f"max_abs_err={max_err}"
    print("KERNEL_OK")
</pallas_src>

<mosaic_0001>
module attributes {stable_mosaic.version = 11 : i64} {
  func.func @kernel(%arg0: i32, %arg1: i32, %arg2: memref<1x1x256x64xf32, #tpu.memory_space<vmem>>, %arg3: memref<1x1x256x64xf32, #tpu.memory_space<vmem>>, %arg4: memref<1x2xf32, #tpu.memory_space<vmem>>) attributes {dimension_semantics = [#tpu.dimension_semantics<arbitrary>, #tpu.dimension_semantics<arbitrary>], iteration_bounds = array<i64: 2, 4>, scalar_prefetch = 0 : i64, scratch_operands = 0 : i64, tpu.core_type = #tpu.core_type<tc>, window_params = [{transform_indices = @transform_0, window_bounds = array<i64: 1, 1, 256, 64>}, {transform_indices = @transform_1, window_bounds = array<i64: 1, 1, 256, 64>}, {pipeline_mode = #tpu.pipeline_mode<synchronous>, transform_indices = @transform_2, window_bounds = array<i64: 1, 2>}]} {
    %c0_i32 = arith.constant 0 : i32
    %0 = arith.cmpi eq, %arg0, %c0_i32 : i32
    %c0_i32_0 = arith.constant 0 : i32
    %1 = arith.cmpi eq, %arg1, %c0_i32_0 : i32
    %2 = arith.andi %0, %1 : i1
    %3 = arith.extui %2 : i1 to i32
    %c0_i32_1 = arith.constant 0 : i32
    %4 = arith.cmpi ne, %3, %c0_i32_1 : i32
    scf.if %4 {
      %cst_26 = arith.constant 0.000000e+00 : f32
      %57 = vector.broadcast %cst_26 : f32 to vector<1x2xf32>
      %c0_27 = arith.constant 0 : index
      %c0_28 = arith.constant 0 : index
      %58 = vector.load %arg4[%c0_27, %c0_28] : memref<1x2xf32, #tpu.memory_space<vmem>>, vector<1x2xf32>
      tpu.vector_store %arg4[%c0_27, %c0_28], %57 {strides = array<i32>} : memref<1x2xf32, #tpu.memory_space<vmem>>, vector<1x2xf32>,
    } else {
    }
    %c0 = arith.constant 0 : index
    %c0_2 = arith.constant 0 : index
    %c0_3 = arith.constant 0 : index
    %c0_4 = arith.constant 0 : index
    %5 = vector.load %arg2[%c0, %c0_2, %c0_3, %c0_4] : memref<1x1x256x64xf32, #tpu.memory_space<vmem>>, vector<1x1x256x64xf32>
    %6 = vector.shape_cast %5 : vector<1x1x256x64xf32> to vector<256x64xf32>
    %cst = arith.constant 1.250000e-01 : f32
    %7 = vector.broadcast %cst : f32 to vector<256x64xf32>
    %8 = arith.mulf %6, %7 : vector<256x64xf32>
    %c0_5 = arith.constant 0 : index
    %c0_6 = arith.constant 0 : index
    %c0_7 = arith.constant 0 : index
    %c0_8 = arith.constant 0 : index
    %9 = vector.load %arg3[%c0_5, %c0_6, %c0_7, %c0_8] : memref<1x1x256x64xf32, #tpu.memory_space<vmem>>, vector<1x1x256x64xf32>
    %10 = vector.shape_cast %9 : vector<1x1x256x64xf32> to vector<256x64xf32>
    %11 = tpu.iota {dimensions = array<i32: 0>} : vector<32x256xi32>
    %12 = tpu.iota {dimensions = array<i32: 1>} : vector<32x256xi32>
    %c8_i32 = arith.constant 8 : i32
    %13 = vector.broadcast %c8_i32 : i32 to vector<32x256xi32>
    %14 = arith.muli %11, %13 : vector<32x256xi32>
    %15 = arith.cmpi sge, %12, %14 : vector<32x256xi32>
    %c8_i32_9 = arith.constant 8 : i32
    %16 = vector.broadcast %c8_i32_9 : i32 to vector<32x256xi32>
    %17 = arith.addi %14, %16 : vector<32x256xi32>
    %18 = arith.cmpi slt, %12, %17 : vector<32x256xi32>
    %19 = arith.andi %15, %18 : vector<32x256xi1>
    %cst_10 = arith.constant 1.250000e-01 : f32
    %cst_11 = arith.constant 0.000000e+00 : f32
    %20 = vector.broadcast %cst_10 : f32 to vector<32x256xf32>
    %21 = vector.broadcast %cst_11 : f32 to vector<32x256xf32>
    %22 = arith.select %19, %20, %21 : vector<32x256xi1>, vector<32x256xf32>
    %cst_12 = arith.constant dense<0.000000e+00> : vector<32x64xf32>
    %23 = tpu.matmul %22, %8, %cst_12 {dimension_numbers = #tpu.dot_dimension_numbers<[1], [0], [0], [1], [0, 0, 1, 1], [], []>} : vector<32x256xf32>, vector<256x64xf32>, vector<32x64xf32> -> vector<32x64xf32>
    %cst_13 = arith.constant dense<0.000000e+00> : vector<32x64xf32>
    %24 = tpu.matmul %22, %10, %cst_13 {dimension_numbers = #tpu.dot_dimension_numbers<[1], [0], [0], [1], [0, 0, 1, 1], [], []>} : vector<32x256xf32>, vector<256x64xf32>, vector<32x64xf32> -> vector<32x64xf32>
    %cst_14 = arith.constant dense<0.000000e+00> : vector<32x32xf32>
    %25 = tpu.matmul %23, %24, %cst_14 {dimension_numbers = #tpu.dot_dimension_numbers<[1], [1], [0], [0], [0, 0, 1, 0], [], []>} : vector<32x64xf32>, vector<32x64xf32>, vector<32x32xf32> -> vector<32x32xf32>
    %cst_15 = arith.constant dense<0xFF800000> : vector<32xf32>
    %26 = vector.multi_reduction <maximumf>, %25, %cst_15 [1] : vector<32x32xf32> to vector<32xf32>
    %27 = vector.shape_cast %26 : vector<32xf32> to vector<32x1xf32>
    %28 = vector.broadcast %27 : vector<32x1xf32> to vector<32x32xf32>
    %29 = arith.subf %25, %28 : vector<32x32xf32>
    %30 = math.exp %29 : vector<32x32xf32>
    %cst_16 = arith.constant dense<0.000000e+00> : vector<32xf32>
    %31 = vector.multi_reduction <add>, %30, %cst_16 [1] : vector<32x32xf32> to vector<32xf32>
    %32 = vector.shape_cast %31 : vector<32xf32> to vector<32x1xf32>
    %33 = vector.broadcast %32 : vector<32x1xf32> to vector<32x32xf32>
    %34 = arith.divf %30, %33 : vector<32x32xf32>
    %35 = math.absf %34 : vector<32x32xf32>
    %cst_17 = arith.constant dense<0.000000e+00> : vector<32xf32>
    %36 = vector.multi_reduction <add>, %35, %cst_17 [1] : vector<32x32xf32> to vector<32xf32>
    %37 = vector.shape_cast %36 : vector<32xf32> to vector<32x1xf32>
    %38 = vector.shape_cast %37 : vector<32x1xf32> to vector<1x32x1xf32>
    %cst_18 = arith.constant dense<0xFF800000> : vector<1xf32>
    %39 = vector.multi_reduction <maximumf>, %38, %cst_18 [1, 2] : vector<1x32x1xf32> to vector<1xf32>
    %40 = vector.shape_cast %39 : vector<1xf32> to vector<1x1x1xf32>
    %41 = vector.extract %40[0, 0, 0] : f32 from vector<1x1x1xf32>
    %cst_19 = arith.constant dense<0.000000e+00> : vector<32xf32>
    %42 = vector.multi_reduction <add>, %35, %cst_19 [0] : vector<32x32xf32> to vector<32xf32>
    %43 = vector.shape_cast %42 : vector<32xf32> to vector<1x32xf32>
    %44 = vector.shape_cast %43 : vector<1x32xf32> to vector<1x1x32xf32>
    %cst_20 = arith.constant dense<0xFF800000> : vector<1xf32>
    %45 = vector.multi_reduction <maximumf>, %44, %cst_20 [1, 2] : vector<1x1x32xf32> to vector<1xf32>
    %46 = vector.shape_cast %45 : vector<1xf32> to vector<1x1x1xf32>
    %47 = vector.extract %46[0, 0, 0] : f32 from vector<1x1x1xf32>
    %48 = tpu.iota {dimensions = array<i32: 1>} : vector<1x2xi32>
    %c0_i32_21 = arith.constant 0 : i32
    %49 = vector.broadcast %c0_i32_21 : i32 to vector<1x2xi32>
    %50 = arith.cmpi eq, %48, %49 : vector<1x2xi32>
    %51 = vector.broadcast %41 : f32 to vector<1x2xf32>
    %52 = vector.broadcast %47 : f32 to vector<1x2xf32>
    %53 = arith.select %50, %51, %52 : vector<1x2xi1>, vector<1x2xf32>
    %c0_22 = arith.constant 0 : index
    %c0_23 = arith.constant 0 : index
    %54 = vector.load %arg4[%c0_22, %c0_23] : memref<1x2xf32, #tpu.memory_space<vmem>>, vector<1x2xf32>
    %55 = arith.maximumf %54, %53 : vector<1x2xf32>
    %c0_24 = arith.constant 0 : index
    %c0_25 = arith.constant 0 : index
    %56 = vector.load %arg4[%c0_24, %c0_25] : memref<1x2xf32, #tpu.memory_space<vmem>>, vector<1x2xf32>
    tpu.vector_store %arg4[%c0_24, %c0_25], %55 {strides = array<i32>} : memref<1x2xf32, #tpu.memory_space<vmem>>, vector<1x2xf32>,
    return
  }
  func.func @transform_0(%arg0: i32, %arg1: i32) -> (i32, i32, i32, i32) {
    %c0_i32 = arith.constant 0 : i32
    %c0_i32_0 = arith.constant 0 : i32
    %c0_i32_1 = arith.constant 0 : i32
    return %arg0, %arg1, %c0_i32, %c0_i32_0 : i32, i32, i32, i32
  }
  func.func @transform_1(%arg0: i32, %arg1: i32) -> (i32, i32, i32, i32) {
    %c0_i32 = arith.constant 0 : i32
    %c0_i32_0 = arith.constant 0 : i32
    %c0_i32_1 = arith.constant 0 : i32
    return %arg0, %arg1, %c0_i32, %c0_i32_0 : i32, i32, i32, i32
  }
  func.func @transform_2(%arg0: i32, %arg1: i32) -> (i32, i32) {
    %c0_i32 = arith.constant 0 : i32
    %c0_i32_0 = arith.constant 0 : i32
    %c0_i32_1 = arith.constant 0 : i32
    return %c0_i32, %c0_i32_0 : i32, i32
  }
}

</mosaic_0001>

<llo_original>
// kernel: tpu_custom_call.1
$region0: #{tpu_custom_call.1}
  #allocation0 [shape = 'u32[]', space=smem, size = 0x4, offset = 0x4, fixed_abs, tag = 'smem constant byte address 0x4 - core index']
  #allocation1 [shape = 'u32[144,128]{1,0:T(1,128)}', space=vmem, size = 0x12000, scoped, tag = 'internal scratch']
  %s0 = inlined_call_operand.vmem [shape: f32[2,4,256,64], index: 0, kind: input, shape index: {}]
  %s1 = inlined_call_operand.vmem [shape: f32[2,4,256,64], index: 1, kind: input, shape index: {}]
  %s2 = inlined_call_operand.hbm [shape: f32[1,2], index: 2, kind: output, shape index: {}]
  %s3 = sld [smem:[#allocation0]]
  $region45: #{tpu_custom_call.1} parent=0
    _
  %s5 = ssub.s32 1, %s3
  %s6 = scalar_select 0, %s5, %s3
  $region1: #{tpu_custom_call.1} parent=0
    #allocation2 [shape = 'u8[512]{0}', space=vmem, size = 0x400, scoped, tag = 'output window, operand 0, single buffered']
    #allocation3 [shape = 's32[2]{0}', space=sflag, size = 0x8, scoped, tag = 'scoped memory for tpu_custom_call.1']
    %7 = vsyncpa [#allocation3], 0
    loop: start=0, step=1, limit=10
    $region2: #{tpu_custom_call.1} parent=1 // loop_pre_header
      _
    $region3: #{tpu_custom_call.1} parent=1 // loop_header
      %s9 = sphi 0, %s13
      %p10 = scmp.ge.s32.totalorder %s9, 10
      %s16 = sphi 0, %s28
      %s17 = sphi 0, %s24
      %s18 = sphi 0, %s16
      %s19 = sphi 0, %s17
      %s20 = sphi 0, %s18
      %s21 = sphi 0, %s19
      %s33 = sphi 0, %s35
      %s36 = sphi 0, %s33
      %s37 = sphi 0, %s36
      %s53 = sphi 0, %s37
      %s61 = sphi 0, %s63
      %s64 = sphi 0, %s61
      %s65 = sphi 0, %s64
      %s81 = sphi 0, %s65
      %s85 = sphi 0, %s85
      %s87 = sphi 0, %s85
      %s88 = sphi 0, %s87
      %s102 = sphi 0, %s88
    $region4: #{tpu_custom_call.1} parent=1 // loop_header_branch
      %12 = sbr.rel (%p10) target = $region8
    $region5: #{tpu_custom_call.1} parent=1 // loop_body
      %s14 = ssub.s32 %s9, 1
      %s15 = ssub.s32 %s9, 2
      %s22 = sadd.s32 1, %s17
      %p23 = scmp.ge.s32.totalorder %s22, 4
      %s24 = scalar_select %p23, 0, %s22
      %s25 = sadd.s32 1, %s16
      %s26 = scalar_select %p23, %s25, %s16
      %p27 = scmp.ge.s32.totalorder %s26, 2
      %s28 = scalar_select %p27, 0, %s26
      %s29 = ssub.s32 %s16, %s28
      %s30 = ssub.s32 %s17, %s24
      %s31 = sor.u32 %s29, %s30
      %p32 = scmp.eq.s32.totalorder %s31, 0
      %s34 = sadd.s32 %s33, 1
      %s35 = scalar_select %p32, %s33, %s34
      %p38 = pneg %p32
      %p39 = scmp.eq.s32.totalorder %s9, 7
      %p40 = por %p38, %p39
      %p41 = scmp.ne.s32.totalorder %s33, %s36
      %p42 = scmp.eq.s32.totalorder %s9, 0
      %p43 = por %p41, %p42
      %p44 = scmp.ne.s32.totalorder %s33, %s36
      %p45 = scmp.eq.s32.totalorder %s14, 7
      %p46 = por %p44, %p45
      %p47 = scmp.ne.s32.totalorder %s36, %s37
      %p48 = scmp.eq.s32.totalorder %s14, 0
      %p49 = por %p47, %p48
      %p50 = scmp.ne.s32.totalorder %s36, %s37
      %p51 = scmp.eq.s32.totalorder %s15, 7
      %p52 = por %p50, %p51
      %p54 = scmp.ne.s32.totalorder %s37, %s53
      %p55 = scmp.eq.s32.totalorder %s15, 0
      %p56 = por %p54, %p55
      %s57 = ssub.s32 %s16, %s28
      %s58 = ssub.s32 %s17, %s24
      %s59 = sor.u32 %s57, %s58
      %p60 = scmp.eq.s32.totalorder %s59, 0
      %s62 = sadd.s32 %s61, 1
      %s63 = scalar_select %p60, %s61, %s62
      %p66 = pneg %p60
      %p67 = scmp.eq.s32.totalorder %s9, 7
      %p68 = por %p66, %p67
      %p69 = scmp.ne.s32.totalorder %s61, %s64
      %p70 = scmp.eq.s32.totalorder %s9, 0
      %p71 = por %p69, %p70
      %p72 = scmp.ne.s32.totalorder %s61, %s64
      %p73 = scmp.eq.s32.totalorder %s14, 7
      %p74 = por %p72, %p73
      %p75 = scmp.ne.s32.totalorder %s64, %s65
      %p76 = scmp.eq.s32.totalorder %s14, 0
      %p77 = por %p75, %p76
      %p78 = scmp.ne.s32.totalorder %s64, %s65
      %p79 = scmp.eq.s32.totalorder %s15, 7
      %p80 = por %p78, %p79
      %p82 = scmp.ne.s32.totalorder %s65, %s81
      %p83 = scmp.eq.s32.totalorder %s15, 0
      %p84 = por %p82, %p83
      %s86 = sadd.s32 %s85, 1
      %p89 = scmp.eq.s32.totalorder %s9, 7
      %p90 = scmp.ne.s32.totalorder %s85, %s87
      %p91 = scmp.eq.s32.totalorder %s9, 0
      %p92 = por %p90, %p91
      %p93 = scmp.ne.s32.totalorder %s85, %s87
      %p94 = scmp.eq.s32.totalorder %s14, 7
      %p95 = por %p93, %p94
      %p96 = scmp.ne.s32.totalorder %s87, %s88
      %p97 = scmp.eq.s32.totalorder %s14, 0
      %p98 = por %p96, %p97
      %p99 = scmp.ne.s32.totalorder %s87, %s88
      %p100 = scmp.eq.s32.totalorder %s15, 7
      %p101 = por %p99, %p100
      %p103 = scmp.ne.s32.totalorder %s88, %s102
      %p104 = scmp.eq.s32.totalorder %s15, 0
      %p105 = por %p103, %p104
      %p106 = scmp.le.s32.totalorder 1, %s9
      %p107 = scmp.lt.s32.totalorder %s9, 9
      %p108 = pnand %p106, %p107
      %p109 = pneg %p108
      // Predicated region
      $region9: #{tpu_custom_call.1} parent=5 // pred_check
        _
      $region10: #{tpu_custom_call.1} parent=5 // pred_check_branch
        %111 = sbr.rel (%p108) target = $region12
      $region11: #{tpu_custom_call.1} parent=5 // pred_region
        %s112 = ssub.s32 %s9, 1
      $region12: #{tpu_custom_call.1} parent=5 // pred_fallthru
        _
      %p113 = scmp.lt.s32.totalorder %s9, 8
      // Predicated region
      $region13: #{tpu_custom_call.1} parent=5 // pred_check
        %p114 = pneg %p113
      $region14: #{tpu_custom_call.1} parent=5 // pred_check_branch
        %116 = sbr.rel (%p114) target = $region16
      $region15: #{tpu_custom_call.1} parent=5 // pred_region
        // Predicated region
        $region17: #{tpu_custom_call.1} parent=15 // pred_check
          %p117 = pneg %p43
        $region18: #{tpu_custom_call.1} parent=15 // pred_check_branch
          %119 = sbr.rel (%p117) target = $region20
        $region19: #{tpu_custom_call.1} parent=15 // pred_region
          %p120 = scmp.lt.s32.totalorder %s16, 1
          %s121 = scalar_select %p120, %s16, 1
          %p122 = scmp.lt.s32.totalorder %s17, 3
          %s123 = scalar_select %p122, %s17, 3
          %s124 = smul.addr %s123, 32
          %s125 = smul.addr %s121, 128
          %s126 = sadd.s32 %s124, %s125
          %s127 = smul.addr %s126, 8
          %s128 = scalar_lea.vmem %s0, %s127
        $region20: #{tpu_custom_call.1} parent=15 // pred_fallthru
          _
        // Predicated region
        $region21: #{tpu_custom_call.1} parent=15 // pred_check
          %p129 = pneg %p71
        $region22: #{tpu_custom_call.1} parent=15 // pred_check_branch
          %131 = sbr.rel (%p129) target = $region24
        $region23: #{tpu_custom_call.1} parent=15 // pred_region
          %p132 = scmp.lt.s32.totalorder %s16, 1
          %s133 = scalar_select %p132, %s16, 1
          %p134 = scmp.lt.s32.totalorder %s17, 3
          %s135 = scalar_select %p134, %s17, 3
          %s136 = smul.addr %s135, 32
          %s137 = smul.addr %s133, 128
          %s138 = sadd.s32 %s136, %s137
          %s139 = smul.addr %s138, 8
          %s140 = scalar_lea.vmem %s1, %s139
        $region24: #{tpu_custom_call.1} parent=15 // pred_fallthru
          _
      $region16: #{tpu_custom_call.1} parent=5 // pred_fallthru
        _
      %p141 = scmp.le.s32.totalorder 1, %s9
      %p142 = scmp.lt.s32.totalorder %s9, 9
      %p143 = pnand %p141, %p142
      %p144 = pneg %p143
      // Predicated region
      $region25: #{tpu_custom_call.1} parent=5 // pred_check
        _
      $region26: #{tpu_custom_call.1} parent=5 // pred_check_branch
        %146 = sbr.rel (%p143) target = $region28
      $region27: #{tpu_custom_call.1} parent=5 // pred_region
        %s147 = ssub.s32 %s9, 1
        %p148 = scmp.lt.s32.totalorder %s18, 1
        %s149 = scalar_select %p148, %s18, 1
        %p150 = scmp.lt.s32.totalorder %s19, 3
        %s151 = scalar_select %p150, %s19, 3
        %s152 = smul.addr %s151, 32
        %s153 = smul.addr %s149, 128
        %s154 = sadd.s32 %s152, %s153
        %s155 = smul.addr %s154, 8
        %s156 = scalar_lea.vmem %s0, %s155
        %p157 = pneg %p49
        %p158 = pneg %p46
        %p159 = scmp.lt.s32.totalorder %s18, 1
        %s160 = scalar_select %p159, %s18, 1
        %p161 = scmp.lt.s32.totalorder %s19, 3
        %s162 = scalar_select %p161, %s19, 3
        %s163 = smul.addr %s162, 32
        %s164 = smul.addr %s160, 128
        %s165 = sadd.s32 %s163, %s164
        %s166 = smul.addr %s165, 8
        %s167 = scalar_lea.vmem %s1, %s166
        %p168 = pneg %p77
        %p169 = pneg %p74
        %p170 = pneg %p98
        %p171 = pneg %p95
        %p172 = scmp.lt.s32.totalorder %s18, 1
        %s173 = scalar_select %p172, %s18, 1
        %p174 = scmp.lt.s32.totalorder %s19, 3
        %s175 = scalar_select %p174, %s19, 3
        %s176 = smul.addr %s175, 32
        %s177 = smul.addr %s173, 128
        %s178 = sadd.s32 %s176, %s177
        %s179 = smul.addr %s178, 8
        %s180 = scalar_lea.vmem %s0, %s179
        %p181 = scmp.lt.s32.totalorder %s18, 1
        %s182 = scalar_select %p181, %s18, 1
        %p183 = scmp.lt.s32.totalorder %s19, 3
        %s184 = scalar_select %p183, %s19, 3
        %s185 = smul.addr %s184, 32
        %s186 = smul.addr %s182, 128
        %s187 = sadd.s32 %s185, %s186
        %s188 = smul.addr %s187, 8
        %s189 = scalar_lea.vmem %s1, %s188
        %p190 = scmp.eq.s32.totalorder %s18, 0
        %p191 = scmp.eq.s32.totalorder %s19, 0
        %p192 = pnand %p190, %p191
        %p193 = pneg %p192
        // Predicated region
        $region29: #{tpu_custom_call.1} parent=27 // pred_check
          _
        $region30: #{tpu_custom_call.1} parent=27 // pred_check_branch
          %195 = sbr.rel (%p192) target = $region32
        $region31: #{tpu_custom_call.1} parent=27 // pred_region
          %vm196 = vcmask 8192
          %197 = vst.msk [vmem:[#allocation2] sm:$0x1] %vm196, 0.0
        $region32: #{tpu_custom_call.1} parent=27 // pred_fallthru
          _
        %v198 = vld [vmem:[%s180] sm:$0xff]
        %v199 = vld [vmem:[%s180 + $0x8] sm:$0xff]
        %v200 = vld [vmem:[%s180 + $0x10] sm:$0xff]
        %v201 = vld [vmem:[%s180 + $0x18] sm:$0xff]
        %v202 = vld [vmem:[%s180 + $0x20] sm:$0xff]
        %v203 = vld [vmem:[%s180 + $0x28] sm:$0xff]
        %v204 = vld [vmem:[%s180 + $0x30] sm:$0xff]
        %v205 = vld [vmem:[%s180 + $0x38] sm:$0xff]
        %v206 = vld [vmem:[%s180 + $0x40] sm:$0xff]
        %v207 = vld [vmem:[%s180 + $0x48] sm:$0xff]
        %v208 = vld [vmem:[%s180 + $0x50] sm:$0xff]
        %v209 = vld [vmem:[%s180 + $0x58] sm:$0xff]
        %v210 = vld [vmem:[%s180 + $0x60] sm:$0xff]
        %v211 = vld [vmem:[%s180 + $0x68] sm:$0xff]
        %v212 = vld [vmem:[%s180 + $0x70] sm:$0xff]
        %v213 = vld [vmem:[%s180 + $0x78] sm:$0xff]
        %v214 = vld [vmem:[%s180 + $0x80] sm:$0xff]
        %v215 = vld [vmem:[%s180 + $0x88] sm:$0xff]
        %v216 = vld [vmem:[%s180 + $0x90] sm:$0xff]
        %v217 = vld [vmem:[%s180 + $0x98] sm:$0xff]
        %v218 = vld [vmem:[%s180 + $0xa0] sm:$0xff]
        %v219 = vld [vmem:[%s180 + $0xa8] sm:$0xff]
        %v220 = vld [vmem:[%s180 + $0xb0] sm:$0xff]
        %v221 = vld [vmem:[%s180 + $0xb8] sm:$0xff]
        %v222 = vld [vmem:[%s180 + $0xc0] sm:$0xff]
        %v223 = vld [vmem:[%s180 + $0xc8] sm:$0xff]
        %v224 = vld [vmem:[%s180 + $0xd0] sm:$0xff]
        %v225 = vld [vmem:[%s180 + $0xd8] sm:$0xff]
        %v226 = vld [vmem:[%s180 + $0xe0] sm:$0xff]
        %v227 = vld [vmem:[%s180 + $0xe8] sm:$0xff]
        %v228 = vld [vmem:[%s180 + $0xf0] sm:$0xff]
        %v229 = vld [vmem:[%s180 + $0xf8] sm:$0xff]
        %v230 = vmul.f32 %v198, 0.125
        %v231 = vmul.f32 %v199, 0.125
        %v232 = vmul.f32 %v200, 0.125
        %v233 = vmul.f32 %v201, 0.125
        %v234 = vmul.f32 %v202, 0.125
        %v235 = vmul.f32 %v203, 0.125
        %v236 = vmul.f32 %v204, 0.125
        %v237 = vmul.f32 %v205, 0.125
        %v238 = vmul.f32 %v206, 0.125
        %v239 = vmul.f32 %v207, 0.125
        %v240 = vmul.f32 %v208, 0.125
        %v241 = vmul.f32 %v209, 0.125
        %v242 = vmul.f32 %v210, 0.125
        %v243 = vmul.f32 %v211, 0.125
        %v244 = vmul.f32 %v212, 0.125
        %v245 = vmul.f32 %v213, 0.125
        %v246 = vmul.f32 %v214, 0.125
        %v247 = vmul.f32 %v215, 0.125
        %v248 = vmul.f32 %v216, 0.125
        %v249 = vmul.f32 %v217, 0.125
        %v250 = vmul.f32 %v218, 0.125
        %v251 = vmul.f32 %v219, 0.125
        %v252 = vmul.f32 %v220, 0.125
        %v253 = vmul.f32 %v221, 0.125
        %v254 = vmul.f32 %v222, 0.125
        %v255 = vmul.f32 %v223, 0.125
        %v256 = vmul.f32 %v224, 0.125
        %v257 = vmul.f32 %v225, 0.125
        %v258 = vmul.f32 %v226, 0.125
        %v259 = vmul.f32 %v227, 0.125
        %v260 = vmul.f32 %v228, 0.125
        %v261 = vmul.f32 %v229, 0.125
        %v262 = vld [vmem:[%s189] sm:$0xff]
        %v263 = vld [vmem:[%s189 + $0x8] sm:$0xff]
        %v264 = vld [vmem:[%s189 + $0x10] sm:$0xff]
        %v265 = vld [vmem:[%s189 + $0x18] sm:$0xff]
        %v266 = vld [vmem:[%s189 + $0x20] sm:$0xff]
        %v267 = vld [vmem:[%s189 + $0x28] sm:$0xff]
        %v268 = vld [vmem:[%s189 + $0x30] sm:$0xff]
        %v269 = vld [vmem:[%s189 + $0x38] sm:$0xff]
        %v270 = vld [vmem:[%s189 + $0x40] sm:$0xff]
        %v271 = vld [vmem:[%s189 + $0x48] sm:$0xff]
        %v272 = vld [vmem:[%s189 + $0x50] sm:$0xff]
        %v273 = vld [vmem:[%s189 + $0x58] sm:$0xff]
        %v274 = vld [vmem:[%s189 + $0x60] sm:$0xff]
        %v275 = vld [vmem:[%s189 + $0x68] sm:$0xff]
        %v276 = vld [vmem:[%s189 + $0x70] sm:$0xff]
        %v277 = vld [vmem:[%s189 + $0x78] sm:$0xff]
        %v278 = vld [vmem:[%s189 + $0x80] sm:$0xff]
        %v279 = vld [vmem:[%s189 + $0x88] sm:$0xff]
        %v280 = vld [vmem:[%s189 + $0x90] sm:$0xff]
        %v281 = vld [vmem:[%s189 + $0x98] sm:$0xff]
        %v282 = vld [vmem:[%s189 + $0xa0] sm:$0xff]
        %v283 = vld [vmem:[%s189 + $0xa8] sm:$0xff]
        %v284 = vld [vmem:[%s189 + $0xb0] sm:$0xff]
        %v285 = vld [vmem:[%s189 + $0xb8] sm:$0xff]
        %v286 = vld [vmem:[%s189 + $0xc0] sm:$0xff]
        %v287 = vld [vmem:[%s189 + $0xc8] sm:$0xff]
        %v288 = vld [vmem:[%s189 + $0xd0] sm:$0xff]
        %v289 = vld [vmem:[%s189 + $0xd8] sm:$0xff]
        %v290 = vld [vmem:[%s189 + $0xe0] sm:$0xff]
        %v291 = vld [vmem:[%s189 + $0xe8] sm:$0xff]
        %v292 = vld [vmem:[%s189 + $0xf0] sm:$0xff]
        %v293 = vld [vmem:[%s189 + $0xf8] sm:$0xff]
        %v294 = vlaneseq
        %v295 = vshrl.u32 %v294, 7
        %v296 = vadd.s32 %v295, 8
        %v297 = vadd.s32 %v295, 16
        %v298 = vadd.s32 %v295, 24
        %v299 = vlaneseq
        %v300 = vand.u32 %v299, 127
        %v301 = vadd.s32 %v300, 128
        %v302 = vmul.u32 %v295, 8
        %v303 = vmul.u32 %v296, 8
        %v304 = vmul.u32 %v297, 8
        %v305 = vmul.u32 %v298, 8
        %vm306 = vcmp.ge.s32.totalorder %v300, %v302
        %vm307 = vcmp.ge.s32.totalorder %v301, %v302
        %vm308 = vcmp.ge.s32.totalorder %v300, %v303
        %vm309 = vcmp.ge.s32.totalorder %v301, %v303
        %vm310 = vcmp.ge.s32.totalorder %v300, %v304
        %vm311 = vcmp.ge.s32.totalorder %v301, %v304
        %vm312 = vcmp.ge.s32.totalorder %v300, %v305
        %vm313 = vcmp.ge.s32.totalorder %v301, %v305
        %v314 = vadd.s32 %v302, 8
        %v315 = vadd.s32 %v303, 8
        %v316 = vadd.s32 %v304, 8
        %v317 = vadd.s32 %v305, 8
        %vm318 = vcmp.lt.s32.totalorder %v300, %v314
        %vm319 = vcmp.lt.s32.totalorder %v301, %v314
        %vm320 = vcmp.lt.s32.totalorder %v300, %v315
        %vm321 = vcmp.lt.s32.totalorder %v301, %v315
        %vm322 = vcmp.lt.s32.totalorder %v300, %v316
        %vm323 = vcmp.lt.s32.totalorder %v301, %v316
        %vm324 = vcmp.lt.s32.totalorder %v300, %v317
        %vm325 = vcmp.lt.s32.totalorder %v301, %v317
        %vm326 = vmand %vm306, %vm318
        %vm327 = vmand %vm307, %vm319
        %vm328 = vmand %vm308, %vm320
        %vm329 = vmand %vm309, %vm321
        %vm330 = vmand %vm310, %vm322
        %vm331 = vmand %vm311, %vm323
        %vm332 = vmand %vm312, %vm324
        %vm333 = vmand %vm313, %vm325
        %v334 = vsel %vm326, 0.125, 0.0
        %v335 = vsel %vm327, 0.125, 0.0
        %v336 = vsel %vm328, 0.125, 0.0
        %v337 = vsel %vm329, 0.125, 0.0
        %v338 = vsel %vm330, 0.125, 0.0
        %v339 = vsel %vm331, 0.125, 0.0
        %v340 = vsel %vm332, 0.125, 0.0
        %v341 = vsel %vm333, 0.125, 0.0
        %342 = vmatprep.subr.mxu0 0.0
        %343 = vmatpush1.msra.mxu0 %v245
        %344 = vmatprep.subr.mxu0 0.0
        %345 = vmatpush1.msra.mxu0 %v244
        %346 = vmatprep.subr.mxu0 0.0
        %347 = vmatpush1.msra.mxu0 %v243
        %348 = vmatprep.subr.mxu0 0.0
        %349 = vmatpush1.msra.mxu0 %v242
        %350 = vmatprep.subr.mxu0 0.0
        %351 = vmatpush1.msra.mxu0 %v241
        %352 = vmatprep.subr.mxu0 0.0
        %353 = vmatpush1.msra.mxu0 %v240
        %354 = vmatprep.subr.mxu0 0.0
        %355 = vmatpush1.msra.mxu0 %v239
        %356 = vmatprep.subr.mxu0 0.0
        %357 = vmatpush1.msra.mxu0 %v238
        %358 = vmatprep.subr.mxu0 0.0
        %359 = vmatpush1.msra.mxu0 %v237
        %360 = vmatprep.subr.mxu0 0.0
        %361 = vmatpush1.msra.mxu0 %v236
        %362 = vmatprep.subr.mxu0 0.0
        %363 = vmatpush1.msra.mxu0 %v235
        %364 = vmatprep.subr.mxu0 0.0
        %365 = vmatpush1.msra.mxu0 %v234
        %366 = vmatprep.subr.mxu0 0.0
        %367 = vmatpush1.msra.mxu0 %v233
        %368 = vmatprep.subr.mxu0 0.0
        %369 = vmatpush1.msra.mxu0 %v232
        %370 = vmatprep.subr.mxu0 0.0
        %371 = vmatpush1.msra.mxu0 %v231
        %372 = vmatprep.subr.mxu0 0.0
        %373 = vmatpush1.msra.mxu0 %v230
        %374 = vmatprep.subr.mxu0 0.0
        %375 = vmatpush2.msra.mxu0 %v261
        %376 = vmatprep.subr.mxu0 0.0
        %377 = vmatpush2.msra.mxu0 %v260
        %378 = vmatprep.subr.mxu0 0.0
        %379 = vmatpush2.msra.mxu0 %v259
        %380 = vmatprep.subr.mxu0 0.0
        %381 = vmatpush2.msra.mxu0 %v258
        %382 = vmatprep.subr.mxu0 0.0
        %383 = vmatpush2.msra.mxu0 %v257
        %384 = vmatprep.subr.mxu0 0.0
        %385 = vmatpush2.msra.mxu0 %v256
        %386 = vmatprep.subr.mxu0 0.0
        %387 = vmatpush2.msra.mxu0 %v255
        %388 = vmatprep.subr.mxu0 0.0
        %389 = vmatpush2.msra.mxu0 %v254
        %390 = vmatprep.subr.mxu0 0.0
        %391 = vmatpush2.msra.mxu0 %v253
        %392 = vmatprep.subr.mxu0 0.0
        %393 = vmatpush2.msra.mxu0 %v252
        %394 = vmatprep.subr.mxu0 0.0
        %395 = vmatpush2.msra.mxu0 %v251
        %396 = vmatprep.subr.mxu0 0.0
        %397 = vmatpush2.msra.mxu0 %v250
        %398 = vmatprep.subr.mxu0 0.0
        %399 = vmatpush2.msra.mxu0 %v249
        %400 = vmatprep.subr.mxu0 0.0
        %401 = vmatpush2.msra.mxu0 %v248
        %402 = vmatprep.subr.mxu0 0.0
        %403 = vmatpush2.msra.mxu0 %v247
        %404 = vmatprep.subr.mxu0 0.0
        %405 = vmatpush2.msra.mxu0 %v246
        %406 = vmatprep.mubr.f32.mxu0 %v335
        %407 = vmatmul.mubr.f32.gmra.mxu0 %v334
        %v408 = vpop.f32.mrf.mxu0
        %v409 = vadd.f32 0.0, %v408
        %v410 = vpop.f32.mrf.mxu0
        %411 = vmatprep.mubr.f32.mxu0 %v337
        %412 = vmatmul.mubr.f32.gmra.mxu0 %v336
        %v413 = vpop.f32.mrf.mxu0
        %v414 = vadd.f32 0.0, %v413
        %v415 = vpop.f32.mrf.mxu0
        %416 = vmatprep.mubr.f32.mxu0 %v339
        %417 = vmatmul.mubr.f32.gmra.mxu0 %v338
        %v418 = vpop.f32.mrf.mxu0
        %v419 = vadd.f32 0.0, %v418
        %v420 = vpop.f32.mrf.mxu0
        %421 = vmatprep.mubr.f32.mxu0 %v341
        %422 = vmatmul.mubr.f32.gmra.mxu0 %v340
        %v423 = vpop.f32.mrf.mxu0
        %v424 = vadd.f32 0.0, %v423
        %v425 = vpop.f32.mrf.mxu0
        %426 = vdwg.mxu0
        %427 = vmatprep.subr.mxu0 0.0
        %428 = vmatpush1.msra.mxu0 %v277
        %429 = vmatprep.subr.mxu0 0.0
        %430 = vmatpush1.msra.mxu0 %v276
        %431 = vmatprep.subr.mxu0 0.0
        %432 = vmatpush1.msra.mxu0 %v275
        %433 = vmatprep.subr.mxu0 0.0
        %434 = vmatpush1.msra.mxu0 %v274
        %435 = vmatprep.subr.mxu0 0.0
        %436 = vmatpush1.msra.mxu0 %v273
        %437 = vmatprep.subr.mxu0 0.0
        %438 = vmatpush1.msra.mxu0 %v272
        %439 = vmatprep.subr.mxu0 0.0
        %440 = vmatpush1.msra.mxu0 %v271
        %441 = vmatprep.subr.mxu0 0.0
        %442 = vmatpush1.msra.mxu0 %v270
        %443 = vmatprep.subr.mxu0 0.0
        %444 = vmatpush1.msra.mxu0 %v269
        %445 = vmatprep.subr.mxu0 0.0
        %446 = vmatpush1.msra.mxu0 %v268
        %447 = vmatprep.subr.mxu0 0.0
        %448 = vmatpush1.msra.mxu0 %v267
        %449 = vmatprep.subr.mxu0 0.0
        %450 = vmatpush1.msra.mxu0 %v266
        %451 = vmatprep.subr.mxu0 0.0
        %452 = vmatpush1.msra.mxu0 %v265
        %453 = vmatprep.subr.mxu0 0.0
        %454 = vmatpush1.msra.mxu0 %v264
        %455 = vmatprep.subr.mxu0 0.0
        %456 = vmatpush1.msra.mxu0 %v263
        %457 = vmatprep.subr.mxu0 0.0
        %458 = vmatpush1.msra.mxu0 %v262
        %459 = vmatprep.subr.mxu0 0.0
        %460 = vmatpush2.msra.mxu0 %v293
        %461 = vmatprep.subr.mxu0 0.0
        %462 = vmatpush2.msra.mxu0 %v292
        %463 = vmatprep.subr.mxu0 0.0
        %464 = vmatpush2.msra.mxu0 %v291
        %465 = vmatprep.subr.mxu0 0.0
        %466 = vmatpush2.msra.mxu0 %v290
        %467 = vmatprep.subr.mxu0 0.0
        %468 = vmatpush2.msra.mxu0 %v289
        %469 = vmatprep.subr.mxu0 0.0
        %470 = vmatpush2.msra.mxu0 %v288
        %471 = vmatprep.subr.mxu0 0.0
        %472 = vmatpush2.msra.mxu0 %v287
        %473 = vmatprep.subr.mxu0 0.0
        %474 = vmatpush2.msra.mxu0 %v286
        %475 = vmatprep.subr.mxu0 0.0
        %476 = vmatpush2.msra.mxu0 %v285
        %477 = vmatprep.subr.mxu0 0.0
        %478 = vmatpush2.msra.mxu0 %v284
        %479 = vmatprep.subr.mxu0 0.0
        %480 = vmatpush2.msra.mxu0 %v283
        %481 = vmatprep.subr.mxu0 0.0
        %482 = vmatpush2.msra.mxu0 %v282
        %483 = vmatprep.subr.mxu0 0.0
        %484 = vmatpush2.msra.mxu0 %v281
        %485 = vmatprep.subr.mxu0 0.0
        %486 = vmatpush2.msra.mxu0 %v280
        %487 = vmatprep.subr.mxu0 0.0
        %488 = vmatpush2.msra.mxu0 %v279
        %489 = vmatprep.subr.mxu0 0.0
        %490 = vmatpush2.msra.mxu0 %v278
        %491 = vmatprep.mubr.f32.mxu0 %v335
        %492 = vmatmul.mubr.f32.gmra.mxu0 %v334
        %v493 = vpop.f32.mrf.mxu0
        %v494 = vadd.f32 0.0, %v493
        %v495 = vpop.f32.mrf.mxu0
        %496 = vmatprep.mubr.f32.mxu0 %v337
        %497 = vmatmul.mubr.f32.gmra.mxu0 %v336
        %v498 = vpop.f32.mrf.mxu0
        %v499 = vadd.f32 0.0, %v498
        %v500 = vpop.f32.mrf.mxu0
        %501 = vmatprep.mubr.f32.mxu0 %v339
        %502 = vmatmul.mubr.f32.gmra.mxu0 %v338
        %v503 = vpop.f32.mrf.mxu0
        %v504 = vadd.f32 0.0, %v503
        %v505 = vpop.f32.mrf.mxu0
        %506 = vmatprep.mubr.f32.mxu0 %v341
        %507 = vmatmul.mubr.f32.gmra.mxu0 %v340
        %v508 = vpop.f32.mrf.mxu0
        %v509 = vadd.f32 0.0, %v508
        %v510 = vpop.f32.mrf.mxu0
        %511 = vdwg.mxu0
        %vm512 = vcmask 523264
        %v514 = vsel %vm512, %v409, 0
        %v517 = vsel %vm512, %v414, 0
        %v520 = vsel %vm512, %v419, 0
        %v523 = vsel %vm512, %v424, 0
        %v526 = vsel %vm512, %v494, 0
        %v529 = vsel %vm512, %v499, 0
        %v532 = vsel %vm512, %v504, 0
        %v535 = vsel %vm512, %v509, 0
        %537 = vmatprep.subr.mxu0 0.0
        %538 = vmatpush1.xpose.msra.mxu0 0.0
        %539 = vmatprep.subr.mxu0 0.0
        %540 = vmatpush1.xpose.msra.mxu0 0.0
        %541 = vmatprep.subr.mxu0 0.0
        %542 = vmatpush1.xpose.msra.mxu0 0.0
        %543 = vmatprep.subr.mxu0 0.0
        %544 = vmatpush1.xpose.msra.mxu0 0.0
        %545 = vmatprep.subr.mxu0 0.0
        %546 = vmatpush1.xpose.msra.mxu0 0.0
        %547 = vmatprep.subr.mxu0 0.0
        %548 = vmatpush1.xpose.msra.mxu0 0.0
        %549 = vmatprep.subr.mxu0 0.0
        %550 = vmatpush1.xpose.msra.mxu0 0.0
        %551 = vmatprep.subr.mxu0 0.0
        %552 = vmatpush1.xpose.msra.mxu0 0.0
        %553 = vmatprep.subr.mxu0 0.0
        %554 = vmatpush1.xpose.msra.mxu0 0.0
        %555 = vmatprep.subr.mxu0 0.0
        %556 = vmatpush1.xpose.msra.mxu0 0.0
        %557 = vmatprep.subr.mxu0 0.0
        %558 = vmatpush1.xpose.msra.mxu0 0.0
        %559 = vmatprep.subr.mxu0 0.0
        %560 = vmatpush1.xpose.msra.mxu0 0.0
        %561 = vmatprep.subr.mxu0 0.0
        %562 = vmatpush1.xpose.msra.mxu0 %v535
        %563 = vmatprep.subr.mxu0 0.0
        %564 = vmatpush1.xpose.msra.mxu0 %v532
        %565 = vmatprep.subr.mxu0 0.0
        %566 = vmatpush1.xpose.msra.mxu0 %v529
        %567 = vmatprep.subr.mxu0 0.0
        %568 = vmatpush1.xpose.msra.mxu0 %v526
        %569 = vmatprep.subr.mxu0 0.0
        %570 = vmatpush2.xpose.msra.mxu0 0.0
        %571 = vmatprep.subr.mxu0 0.0
        %572 = vmatpush2.xpose.msra.mxu0 0.0
        %573 = vmatprep.subr.mxu0 0.0
        %574 = vmatpush2.xpose.msra.mxu0 0.0
        %575 = vmatprep.subr.mxu0 0.0
        %576 = vmatpush2.xpose.msra.mxu0 0.0
        %577 = vmatprep.subr.mxu0 0.0
        %578 = vmatpush2.xpose.msra.mxu0 0.0
        %579 = vmatprep.subr.mxu0 0.0
        %580 = vmatpush2.xpose.msra.mxu0 0.0
        %581 = vmatprep.subr.mxu0 0.0
        %582 = vmatpush2.xpose.msra.mxu0 0.0
        %583 = vmatprep.subr.mxu0 0.0
        %584 = vmatpush2.xpose.msra.mxu0 0.0
        %585 = vmatprep.subr.mxu0 0.0
        %586 = vmatpush2.xpose.msra.mxu0 0.0
        %587 = vmatprep.subr.mxu0 0.0
        %588 = vmatpush2.xpose.msra.mxu0 0.0
        %589 = vmatprep.subr.mxu0 0.0
        %590 = vmatpush2.xpose.msra.mxu0 0.0
        %591 = vmatprep.subr.mxu0 0.0
        %592 = vmatpush2.xpose.msra.mxu0 0.0
        %593 = vmatprep.subr.mxu0 0.0
        %594 = vmatpush2.xpose.msra.mxu0 0.0
        %595 = vmatprep.subr.mxu0 0.0
        %596 = vmatpush2.xpose.msra.mxu0 0.0
        %597 = vmatprep.subr.mxu0 0.0
        %598 = vmatpush2.xpose.msra.mxu0 0.0
        %599 = vmatprep.subr.mxu0 0.0
        %600 = vmatpush2.xpose.msra.mxu0 0.0
        %601 = vmatprep.mubr.f32.mxu0 0.0
        %602 = vmatmul.mubr.f32.gmra.mxu0 %v514
        %v603 = vpop.f32.mrf.mxu0
        %v604 = vadd.f32 0.0, %v603
        %v605 = vpop.f32.mrf.mxu0
        %606 = vmatprep.mubr.f32.mxu0 0.0
        %607 = vmatmul.mubr.f32.gmra.mxu0 %v517
        %v608 = vpop.f32.mrf.mxu0
        %v609 = vadd.f32 0.0, %v608
        %v610 = vpop.f32.mrf.mxu0
        %611 = vmatprep.mubr.f32.mxu0 0.0
        %612 = vmatmul.mubr.f32.gmra.mxu0 %v520
        %v613 = vpop.f32.mrf.mxu0
        %v614 = vadd.f32 0.0, %v613
        %v615 = vpop.f32.mrf.mxu0
        %616 = vmatprep.mubr.f32.mxu0 0.0
        %617 = vmatmul.mubr.f32.gmra.mxu0 %v523
        %v618 = vpop.f32.mrf.mxu0
        %v619 = vadd.f32 0.0, %v618
        %v620 = vpop.f32.mrf.mxu0
        %621 = vdwg.mxu0
        %vm622 = vcmask 261120
        %v623 = vsel %vm622, %v604, -inf
        %624 = vmax.xlane.f32.xlu0 %v623
        %v625 = vpop.xlane.xlu0 %624
        %v626 = vsel %vm622, %v609, -inf
        %627 = vmax.xlane.f32.xlu0 %v626
        %v628 = vpop.xlane.xlu0 %627
        %v629 = vsel %vm622, %v614, -inf
        %630 = vmax.xlane.f32.xlu0 %v629
        %v631 = vpop.xlane.xlu0 %630
        %v632 = vsel %vm622, %v619, -inf
        %633 = vmax.xlane.f32.xlu0 %v632
        %v634 = vpop.xlane.xlu0 %633
        %v635 = vsub.f32 %v604, %v625
        %v636 = vsub.f32 %v609, %v628
        %v637 = vsub.f32 %v614, %v631
        %v638 = vsub.f32 %v619, %v634
        %v639 = vmul.f32 %v635, 1.442695
        %v640 = vpow.pop %v639
        %v641 = vmul.f32 %v636, 1.442695
        %v642 = vpow.pop %v641
        %v643 = vmul.f32 %v637, 1.442695
        %v644 = vpow.pop %v643
        %v645 = vmul.f32 %v638, 1.442695
        %v646 = vpow.pop %v645
        %v647 = vsel %vm622, %v640, 0.0
        %648 = vadd.xlane.f32.xlu0 %v647
        %v649 = vpop.xlane.xlu0 %648
        %v650 = vsel %vm622, %v642, 0.0
        %651 = vadd.xlane.f32.xlu0 %v650
        %v652 = vpop.xlane.xlu0 %651
        %v653 = vsel %vm622, %v644, 0.0
        %654 = vadd.xlane.f32.xlu0 %v653
        %v655 = vpop.xlane.xlu0 %654
        %v656 = vsel %vm622, %v646, 0.0
        %657 = vadd.xlane.f32.xlu0 %v656
        %v658 = vpop.xlane.xlu0 %657
        %v659 = vrcp.pop %v649
        %v660 = vmul.f32 %v640, %v659
        %v661 = vrcp.pop %v652
        %v662 = vmul.f32 %v642, %v661
        %v663 = vrcp.pop %v655
        %v664 = vmul.f32 %v644, %v663
        %v665 = vrcp.pop %v658
        %v666 = vmul.f32 %v646, %v665
        %v667 = vand.u32 2147483647, %v660
        %v668 = vand.u32 2147483647, %v662
        %v669 = vand.u32 2147483647, %v664
        %v670 = vand.u32 2147483647, %v666
        %v671 = vsel %vm622, %v667, 0.0
        %672 = vadd.xlane.f32.xlu0 %v671
        %v673 = vpop.xlane.xlu0 %672
        %v674 = vsel %vm622, %v668, 0.0
        %675 = vadd.xlane.f32.xlu0 %v674
        %v676 = vpop.xlane.xlu0 %675
        %v677 = vsel %vm622, %v669, 0.0
        %678 = vadd.xlane.f32.xlu0 %v677
        %v679 = vpop.xlane.xlu0 %678
        %v680 = vsel %vm622, %v670, 0.0
        %681 = vadd.xlane.f32.xlu0 %v680
        %v682 = vpop.xlane.xlu0 %681
        %v683 = vmax.f32 %v673, %v676
        %v684 = vmax.f32 %v679, %v682
        %v685 = vmax.f32 %v683, %v684
        %v686 = vrot.slane %v685, 4
        %v687 = vmax.f32 %v685, %v686
        %v688 = vrot.slane %v687, 2
        %v689 = vmax.f32 %v687, %v688
        %v690 = vrot.slane %v689, 1
        %v691 = vmax.f32 %v689, %v690
        %s692 = vtos %v691
        %v693 = vadd.f32 %v671, %v674
        %v694 = vadd.f32 %v693, %v677
        %v695 = vadd.f32 %v694, %v680
        %v696 = vrot.slane %v695, 4
        %v697 = vadd.f32 %v695, %v696
        %v698 = vrot.slane %v697, 2
        %v699 = vadd.f32 %v697, %v698
        %v700 = vrot.slane %v699, 1
        %v701 = vadd.f32 %v699, %v700
        %v702 = vsel %vm622, %v701, -inf
        %703 = vmax.xlane.f32.xlu0 %v702
        %v704 = vpop.xlane.xlu0 %703
        %s705 = vtos %v704
        %vm706 = vcmp.eq.s32.totalorder %v300, 0
        %v707 = vstv %s692
        %v708 = vstv %s705
        %v709 = vsel %vm706, %v707, %v708
        %v710 = vld [vmem:[#allocation2] sm:$0x1]
        %v711 = vmax.f32 %v710, %v709
        %vm712 = vcmask 8192
        %713 = vst.msk [vmem:[#allocation2] sm:$0x1] %vm712, %v711
        // Predicated region
        $region33: #{tpu_custom_call.1} parent=27 // pred_check
          %p714 = pneg %p95
        $region34: #{tpu_custom_call.1} parent=27 // pred_check_branch
          %716 = sbr.rel (%p714) target = $region36
        $region35: #{tpu_custom_call.1} parent=27 // pred_region
          %s718 = ssub.s32 16, 16
          %719 = vsyncadd [#allocation3], %s718
          %s721 = sshll.u32 [#allocation2], 4
          %s722 = int_to_ptr.vmem [resolvable:$true] %s721
          %724 = dma.vmem_to_hbm [thread:$0]  %s722, 16, %s2, [#allocation3]
        $region36: #{tpu_custom_call.1} parent=27 // pred_fallthru
          _
        // Predicated region
        $region37: #{tpu_custom_call.1} parent=27 // pred_check
          %p725 = pneg %p95
        $region38: #{tpu_custom_call.1} parent=27 // pred_check_branch
          %727 = sbr.rel (%p725) target = $region40
        $region39: #{tpu_custom_call.1} parent=27 // pred_region
          %728 = dma.done [#allocation3], 16
        $region40: #{tpu_custom_call.1} parent=27 // pred_fallthru
          _
      $region28: #{tpu_custom_call.1} parent=5 // pred_fallthru
        _
      %p729 = scmp.le.s32.totalorder 2, %s9
      // Predicated region
      $region41: #{tpu_custom_call.1} parent=5 // pred_check
        %p730 = pneg %p729
      $region42: #{tpu_custom_call.1} parent=5 // pred_check_branch
        %732 = sbr.rel (%p730) target = $region44
      $region43: #{tpu_custom_call.1} parent=5 // pred_region
        %s733 = ssub.s32 %s9, 2
      $region44: #{tpu_custom_call.1} parent=5 // pred_fallthru
        _
    $region6: #{tpu_custom_call.1} parent=1 // loop_footer
      %s13 = sadd.s32 1, %s9
    $region7: #{tpu_custom_call.1} parent=1 // loop_footer_branch
      %8 = sbr.rel target = $region3
    $region8: #{tpu_custom_call.1} parent=1 // loop_exit
      _
    %734 = vsyncpa [#allocation3], 1
    %s735 = scalar_lea.sflag [#allocation3], 1
    %736 = vsyncpa %s735, 1

</llo_original>
